<compile_context>
chip_gen: v7x
topology: tpu7x:2x2x1
jax: 0.10.0
libtpu: 0.0.40
codegen_flags: <defaults>
</compile_context>

<pallas_src>
import functools

import jax
import jax.numpy as jnp
from jax import lax
from jax.experimental import pallas as pl
from jax.experimental.pallas import tpu as pltpu
import numpy as np


def _inorm_gelu_rows(x, eps=1e-5):
    """x: (C, S) f32 -- InstanceNorm over the S lanes of each row, then tanh-GELU."""
    n = x.shape[1]
    mean = jnp.sum(x, axis=1, keepdims=True) * (1.0 / n)
    xc = x - mean
    var = jnp.sum(xc * xc, axis=1, keepdims=True) * (1.0 / n)   # two-pass: robust
    return jax.nn.gelu(xc * lax.rsqrt(var + eps), approximate=True)


def _make_decoder_kernel(H, W, Cin, Bt, n_groups, taps_per_group):
    HW = H * W
    N_TAPS = 25

    def kernel(x_ref, wf_ref, wt_ref, o_ref, col_ref):
        # ---- stage 1: InstanceNorm + GELU on the raw input, per batch item
        xa = [_inorm_gelu_rows(x_ref[b]) for b in range(Bt)]          # Bt x (Cin, HW) f32

        # ---- in-kernel tap validity masks (lane-index based, no extra input)
        lane = lax.broadcasted_iota(jnp.int32, (Cin, HW), 1)
        col_id = lane % W                                             # x coordinate
        xmask = {dx: jnp.logical_and(col_id + dx >= 0, col_id + dx < W)
                 for dx in range(-2, 3)}
        ymask = {dy: jnp.logical_and(lane >= (-dy) * W, lane < (H - dy) * W)
                 for dy in range(-2, 3)}

        # ---- im2col: register-resident lane rolls, tap-grouped tile-aligned bf16 stores
        for g in range(n_groups):
            parts = []
            for tt in range(taps_per_group):
                t = g * taps_per_group + tt
                if t < N_TAPS:
                    ky, kx = divmod(t, 5)
                    dy, dx = ky - 2, kx - 2
                    off = dy * W + dx
                    valid = jnp.logical_and(ymask[dy], xmask[dx])
                    per_b = []
                    for b in range(Bt):
                        sh = (-off) % HW                              # slab[s] = xa[(s+off) % HW]
                        rolled = xa[b] if sh == 0 else pltpu.roll(xa[b], shift=sh, axis=1)
                        per_b.append(jnp.where(valid, rolled, 0.0))   # kill the wraparound
                    slab = per_b[0] if Bt == 1 else jnp.concatenate(per_b, axis=1)
                else:                                                 # K padding taps
                    slab = jnp.zeros((Cin, Bt * HW), jnp.float32)
                parts.append(slab)
            grp = parts[0] if taps_per_group == 1 else jnp.concatenate(parts, axis=0)
            r0 = g * taps_per_group * Cin
            col_ref[r0:r0 + taps_per_group * Cin, :] = grp.astype(jnp.bfloat16)

        # ---- fused 1x1 / 3x3 / 5x5 conv: ONE bf16 MXU matmul (K=112, N=Bt*HW)
        incep = jnp.dot(wf_ref[...], col_ref[...],
                        preferred_element_type=jnp.float32)           # (Mp, Bt*HW) f32

        # ---- UpSample: per-batch InstanceNorm + GELU + ConvTranspose2d(k=2, s=2, p=0)
        #      (kernel == stride -> the 2x2 taps are one matmul; interleave in wrapper)
        ya_parts = [_inorm_gelu_rows(incep[:, b * HW:(b + 1) * HW]).astype(jnp.bfloat16)
                    for b in range(Bt)]
        ya = ya_parts[0] if Bt == 1 else jnp.concatenate(ya_parts, axis=1)
        out = jnp.dot(wt_ref[...], ya, preferred_element_type=jnp.float32)  # (4*Cout, Bt*HW)

        for b in range(Bt):                                           # 256-lane unmasked stores
            o_ref[b] = out[:, b * HW:(b + 1) * HW]

    return kernel


def _round_up(x, m):
    return (x + m - 1) // m * m


@functools.partial(jax.jit, static_argnames=("batch_per_step",))
def decoder_forward(x_nchw, w1, w3, w5, wt, *, batch_per_step=1):
    """x_nchw: (B, Cin, H, W).  PyTorch weight layouts:
       w1:(Cout,Cin,1,1)  w3:(Cout,Cin,3,3)  w5:(Cout,Cin,5,5)  wt:(3*Cout,Cout,2,2).

    batch_per_step: batch items processed per grid step.  Use B on single-TC
    chips (v5e/v6e); keep B // 2 (i.e. >= 2 grid steps) on v7x (2 TCs/chip).
    """
    B, Cin, H, W = x_nchw.shape
    Cout = w1.shape[0]
    HW = H * W
    Bt = batch_per_step
    assert B % Bt == 0, "batch_per_step must divide the batch size"

    # tap grouping so each im2col store is one 16-row bf16 sublane tile
    tpg = (16 // Cin) if (16 % Cin == 0 and Cin <= 16) else 1
    n_groups = -(-25 // tpg)
    Kp = n_groups * tpg * Cin                     # 112 for Cin=4
    Mp = _round_up(3 * Cout, 16)                  # 16 for Cout=4

    x2 = x_nchw.reshape(B, Cin, HW).astype(jnp.float32)   # channel-major: free reshape

    # fused conv weight, tap-major / channel-minor: wf[ky, kx, ci, branch_out]
    wf = jnp.zeros((5, 5, Cin, 3 * Cout), jnp.float32)
    wf = wf.at[:, :, :, 2 * Cout:].set(jnp.transpose(w5, (2, 3, 1, 0)))           # 5x5 branch
    wf = wf.at[1:4, 1:4, :, Cout:2 * Cout].set(jnp.transpose(w3, (2, 3, 1, 0)))   # 3x3 branch
    wf = wf.at[2, 2, :, :Cout].set(jnp.transpose(w1[:, :, 0, 0], (1, 0)))         # 1x1 branch
    wfT = jnp.transpose(wf.reshape(25 * Cin, 3 * Cout), (1, 0))                   # (12, 100)
    wfT = (jnp.zeros((Mp, Kp), jnp.float32)
           .at[:3 * Cout, :25 * Cin].set(wfT).astype(jnp.bfloat16))               # padded, bf16

    # ConvTranspose weight (ci, co, ki, kj) -> rows (ki, kj, co), cols ci, K padded to Mp
    wtT = jnp.transpose(wt, (2, 3, 1, 0)).reshape(4 * Cout, 3 * Cout)
    wtT = (jnp.zeros((4 * Cout, Mp), jnp.float32)
           .at[:, :3 * Cout].set(wtT).astype(jnp.bfloat16))

    kernel = _make_decoder_kernel(H, W, Cin, Bt, n_groups, tpg)
    out_k = pl.pallas_call(
        kernel,
        out_shape=jax.ShapeDtypeStruct((B, 4 * Cout, HW), jnp.float32),
        grid_spec=pltpu.PrefetchScalarGridSpec(
            num_scalar_prefetch=0,
            grid=(B // Bt,),
            in_specs=[
                pl.BlockSpec((Bt, Cin, HW), lambda i: (i, 0, 0)),
                pl.BlockSpec((Mp, Kp), lambda i: (0, 0)),
                pl.BlockSpec((4 * Cout, Mp), lambda i: (0, 0)),
            ],
            out_specs=pl.BlockSpec((Bt, 4 * Cout, HW), lambda i: (i, 0, 0)),
            scratch_shapes=[
                pltpu.VMEM((Kp, Bt * HW), jnp.bfloat16),   # bf16 im2col slab
            ],
        ),
        compiler_params=pltpu.CompilerParams(
            dimension_semantics=("parallel",)),
    )(x2, wfT, wtT)

    # interleave the 2x2 ConvTranspose taps: rows of out_k are ordered (ki, kj, co)
    # TODO(synk): fuse the kj lane interleave in-kernel for production H,W.
    out_k = out_k.reshape(B, 2, 2, Cout, H, W)
    y = jnp.transpose(out_k, (0, 3, 4, 1, 5, 2)).reshape(B, Cout, 2 * H, 2 * W)
    return y                                                   # NCHW, like PyTorch


def reference_forward(x_nchw, w1, w3, w5, wt):
    """Pure-JAX reference (XLA convs) for correctness checking."""
    x = jnp.transpose(x_nchw, (0, 2, 3, 1)).astype(jnp.float32)

    def inorm_gelu(y):
        mean = jnp.mean(y, axis=(1, 2), keepdims=True)
        var = jnp.mean((y - mean) ** 2, axis=(1, 2), keepdims=True)
        return jax.nn.gelu((y - mean) * lax.rsqrt(var + 1e-5), approximate=True)

    dn = ('NHWC', 'HWIO', 'NHWC')
    xa = inorm_gelu(x)
    o1 = lax.conv_general_dilated(xa, jnp.transpose(w1, (2, 3, 1, 0)), (1, 1), 'SAME',
                                  dimension_numbers=dn)
    o3 = lax.conv_general_dilated(xa, jnp.transpose(w3, (2, 3, 1, 0)), (1, 1), 'SAME',
                                  dimension_numbers=dn)
    o5 = lax.conv_general_dilated(xa, jnp.transpose(w5, (2, 3, 1, 0)), (1, 1), 'SAME',
                                  dimension_numbers=dn)
    incep = jnp.concatenate([o1, o3, o5], axis=-1)

    ya = inorm_gelu(incep)
    # ConvTranspose2d(k=2, s=2, p=0) == conv(lhs dilated by 2, pad 1, spatially flipped kernel)
    wt_hwio = jnp.transpose(wt[:, :, ::-1, ::-1], (2, 3, 0, 1))   # (2,2,Ci,Co)
    up = lax.conv_general_dilated(ya, wt_hwio, (1, 1),
                                  padding=[(1, 1), (1, 1)], lhs_dilation=(2, 2),
                                  dimension_numbers=dn)
    return jnp.transpose(up, (0, 3, 1, 2))


if __name__ == "__main__":
    B, Cin, Cout, H, W = 2, 4, 4, 16, 16
    key = jax.random.PRNGKey(0)
    kx, k1, k3, k5, kt = jax.random.split(key, 5)

    x = jax.random.normal(kx, (B, Cin, H, W), dtype=jnp.float32)
    w1 = 0.2 * jax.random.normal(k1, (Cout, Cin, 1, 1), dtype=jnp.float32)
    w3 = 0.2 * jax.random.normal(k3, (Cout, Cin, 3, 3), dtype=jnp.float32)
    w5 = 0.2 * jax.random.normal(k5, (Cout, Cin, 5, 5), dtype=jnp.float32)
    wt = 0.2 * jax.random.normal(kt, (3 * Cout, Cout, 2, 2), dtype=jnp.float32)

    ref = jax.block_until_ready(reference_forward(x, w1, w3, w5, wt))

    # v7x-style config: one batch item per step, 2 grid steps -> both TensorCores busy
    out1 = jax.block_until_ready(decoder_forward(x, w1, w3, w5, wt, batch_per_step=1))
    # v5e/v6e-style config: whole batch in one grid step (halves per-step overhead, N = B*HW)
    out2 = jax.block_until_ready(decoder_forward(x, w1, w3, w5, wt, batch_per_step=B))

    assert out1.shape == (B, Cout, 2 * H, 2 * W), out1.shape
    assert out2.shape == (B, Cout, 2 * H, 2 * W), out2.shape
    np.testing.assert_allclose(np.asarray(out1), np.asarray(ref), rtol=5e-2, atol=5e-2)
    np.testing.assert_allclose(np.asarray(out2), np.asarray(ref), rtol=5e-2, atol=5e-2)
    print("KERNEL_OK")
</pallas_src>

<mosaic_0001>
module attributes {stable_mosaic.version = 11 : i64} {
  func.func @kernel(%arg0: i32, %arg1: memref<1x4x256xf32, #tpu.memory_space<vmem>>, %arg2: memref<16x112xbf16, #tpu.memory_space<vmem>>, %arg3: memref<16x16xbf16, #tpu.memory_space<vmem>>, %arg4: memref<1x16x256xf32, #tpu.memory_space<vmem>>, %arg5: memref<112x256xbf16, #tpu.memory_space<vmem>>) attributes {dimension_semantics = [#tpu.dimension_semantics<parallel>], iteration_bounds = array<i64: 2>, scalar_prefetch = 0 : i64, scratch_operands = 1 : i64, tpu.core_type = #tpu.core_type<tc>, window_params = [{transform_indices = @transform_0, window_bounds = array<i64: 1, 4, 256>}, {pipeline_mode = #tpu.pipeline_mode<synchronous>, transform_indices = @transform_1, window_bounds = array<i64: 16, 112>}, {pipeline_mode = #tpu.pipeline_mode<synchronous>, transform_indices = @transform_2, window_bounds = array<i64: 16, 16>}, {transform_indices = @transform_3, window_bounds = array<i64: 1, 16, 256>}]} {
    %c0 = arith.constant 0 : index
    %c0_0 = arith.constant 0 : index
    %c0_1 = arith.constant 0 : index
    %0 = vector.load %arg1[%c0, %c0_0, %c0_1] : memref<1x4x256xf32, #tpu.memory_space<vmem>>, vector<1x4x256xf32>
    %1 = vector.shape_cast %0 : vector<1x4x256xf32> to vector<4x256xf32>
    %cst = arith.constant dense<0.000000e+00> : vector<4xf32>
    %2 = vector.multi_reduction <add>, %1, %cst [1] : vector<4x256xf32> to vector<4xf32>
    %3 = vector.shape_cast %2 : vector<4xf32> to vector<4x1xf32>
    %cst_2 = arith.constant 3.906250e-03 : f32
    %4 = vector.broadcast %cst_2 : f32 to vector<4x1xf32>
    %5 = arith.mulf %3, %4 : vector<4x1xf32>
    %6 = vector.broadcast %5 : vector<4x1xf32> to vector<4x256xf32>
    %7 = arith.subf %1, %6 : vector<4x256xf32>
    %8 = arith.mulf %7, %7 : vector<4x256xf32>
    %cst_3 = arith.constant dense<0.000000e+00> : vector<4xf32>
    %9 = vector.multi_reduction <add>, %8, %cst_3 [1] : vector<4x256xf32> to vector<4xf32>
    %10 = vector.shape_cast %9 : vector<4xf32> to vector<4x1xf32>
    %cst_4 = arith.constant 3.906250e-03 : f32
    %11 = vector.broadcast %cst_4 : f32 to vector<4x1xf32>
    %12 = arith.mulf %10, %11 : vector<4x1xf32>
    %cst_5 = arith.constant 9.99999974E-6 : f32
    %13 = vector.broadcast %cst_5 : f32 to vector<4x1xf32>
    %14 = arith.addf %12, %13 : vector<4x1xf32>
    %15 = math.rsqrt %14 : vector<4x1xf32>
    %16 = vector.broadcast %15 : vector<4x1xf32> to vector<4x256xf32>
    %17 = arith.mulf %7, %16 : vector<4x256xf32>
    %18 = arith.mulf %17, %17 : vector<4x256xf32>
    %19 = arith.mulf %17, %18 : vector<4x256xf32>
    %cst_6 = arith.constant 4.471500e-02 : f32
    %20 = vector.broadcast %cst_6 : f32 to vector<4x256xf32>
    %21 = arith.mulf %20, %19 : vector<4x256xf32>
    %22 = arith.addf %17, %21 : vector<4x256xf32>
    %cst_7 = arith.constant 0.797884583 : f32
    %23 = vector.broadcast %cst_7 : f32 to vector<4x256xf32>
    %24 = arith.mulf %23, %22 : vector<4x256xf32>
    %25 = math.tanh %24 : vector<4x256xf32>
    %cst_8 = arith.constant 1.000000e+00 : f32
    %26 = vector.broadcast %cst_8 : f32 to vector<4x256xf32>
    %27 = arith.addf %26, %25 : vector<4x256xf32>
    %cst_9 = arith.constant 5.000000e-01 : f32
    %28 = vector.broadcast %cst_9 : f32 to vector<4x256xf32>
    %29 = arith.mulf %28, %27 : vector<4x256xf32>
    %30 = arith.mulf %17, %29 : vector<4x256xf32>
    %31 = tpu.iota {dimensions = array<i32: 1>} : vector<4x256xi32>
    %c16_i32 = arith.constant 16 : i32
    %c0_i32 = arith.constant 0 : i32
    %32 = arith.cmpi eq, %c16_i32, %c0_i32 : i32
    %c1_i32 = arith.constant 1 : i32
    %33 = arith.select %32, %c1_i32, %c16_i32 : i32
    %34 = vector.broadcast %33 : i32 to vector<4x256xi32>
    %35 = arith.remsi %31, %34 : vector<4x256xi32>
    %c0_i32_10 = arith.constant 0 : i32
    %36 = vector.broadcast %c0_i32_10 : i32 to vector<4x256xi32>
    %37 = arith.cmpi ne, %35, %36 : vector<4x256xi32>
    %c0_i32_11 = arith.constant 0 : i32
    %38 = vector.broadcast %c0_i32_11 : i32 to vector<4x256xi32>
    %39 = arith.cmpi slt, %35, %38 : vector<4x256xi32>
    %c0_i32_12 = arith.constant 0 : i32
    %40 = arith.cmpi slt, %33, %c0_i32_12 : i32
    %41 = vector.broadcast %40 : i1 to vector<4x256xi1>
    %42 = vector.broadcast %41 : vector<4x256xi1> to vector<4x256xi1>
    %43 = arith.xori %39, %42 : vector<4x256xi1>
    %44 = arith.andi %43, %37 : vector<4x256xi1>
    %45 = vector.broadcast %33 : i32 to vector<4x256xi32>
    %46 = arith.addi %35, %45 : vector<4x256xi32>
    %47 = arith.select %44, %46, %35 : vector<4x256xi1>, vector<4x256xi32>
    %c-2_i32 = arith.constant -2 : i32
    %48 = vector.broadcast %c-2_i32 : i32 to vector<4x256xi32>
    %49 = arith.addi %47, %48 : vector<4x256xi32>
    %c0_i32_13 = arith.constant 0 : i32
    %50 = vector.broadcast %c0_i32_13 : i32 to vector<4x256xi32>
    %51 = arith.cmpi sge, %49, %50 : vector<4x256xi32>
    %c-2_i32_14 = arith.constant -2 : i32
    %52 = vector.broadcast %c-2_i32_14 : i32 to vector<4x256xi32>
    %53 = arith.addi %47, %52 : vector<4x256xi32>
    %c16_i32_15 = arith.constant 16 : i32
    %54 = vector.broadcast %c16_i32_15 : i32 to vector<4x256xi32>
    %55 = arith.cmpi slt, %53, %54 : vector<4x256xi32>
    %56 = arith.andi %51, %55 : vector<4x256xi1>
    %c-1_i32 = arith.constant -1 : i32
    %57 = vector.broadcast %c-1_i32 : i32 to vector<4x256xi32>
    %58 = arith.addi %47, %57 : vector<4x256xi32>
    %c0_i32_16 = arith.constant 0 : i32
    %59 = vector.broadcast %c0_i32_16 : i32 to vector<4x256xi32>
    %60 = arith.cmpi sge, %58, %59 : vector<4x256xi32>
    %c-1_i32_17 = arith.constant -1 : i32
    %61 = vector.broadcast %c-1_i32_17 : i32 to vector<4x256xi32>
    %62 = arith.addi %47, %61 : vector<4x256xi32>
    %c16_i32_18 = arith.constant 16 : i32
    %63 = vector.broadcast %c16_i32_18 : i32 to vector<4x256xi32>
    %64 = arith.cmpi slt, %62, %63 : vector<4x256xi32>
    %65 = arith.andi %60, %64 : vector<4x256xi1>
    %c0_i32_19 = arith.constant 0 : i32
    %66 = vector.broadcast %c0_i32_19 : i32 to vector<4x256xi32>
    %67 = arith.addi %47, %66 : vector<4x256xi32>
    %c0_i32_20 = arith.constant 0 : i32
    %68 = vector.broadcast %c0_i32_20 : i32 to vector<4x256xi32>
    %69 = arith.cmpi sge, %67, %68 : vector<4x256xi32>
    %c0_i32_21 = arith.constant 0 : i32
    %70 = vector.broadcast %c0_i32_21 : i32 to vector<4x256xi32>
    %71 = arith.addi %47, %70 : vector<4x256xi32>
    %c16_i32_22 = arith.constant 16 : i32
    %72 = vector.broadcast %c16_i32_22 : i32 to vector<4x256xi32>
    %73 = arith.cmpi slt, %71, %72 : vector<4x256xi32>
    %74 = arith.andi %69, %73 : vector<4x256xi1>
    %c1_i32_23 = arith.constant 1 : i32
    %75 = vector.broadcast %c1_i32_23 : i32 to vector<4x256xi32>
    %76 = arith.addi %47, %75 : vector<4x256xi32>
    %c0_i32_24 = arith.constant 0 : i32
    %77 = vector.broadcast %c0_i32_24 : i32 to vector<4x256xi32>
    %78 = arith.cmpi sge, %76, %77 : vector<4x256xi32>
    %c1_i32_25 = arith.constant 1 : i32
    %79 = vector.broadcast %c1_i32_25 : i32 to vector<4x256xi32>
    %80 = arith.addi %47, %79 : vector<4x256xi32>
    %c16_i32_26 = arith.constant 16 : i32
    %81 = vector.broadcast %c16_i32_26 : i32 to vector<4x256xi32>
    %82 = arith.cmpi slt, %80, %81 : vector<4x256xi32>
    %83 = arith.andi %78, %82 : vector<4x256xi1>
    %c2_i32 = arith.constant 2 : i32
    %84 = vector.broadcast %c2_i32 : i32 to vector<4x256xi32>
    %85 = arith.addi %47, %84 : vector<4x256xi32>
    %c0_i32_27 = arith.constant 0 : i32
    %86 = vector.broadcast %c0_i32_27 : i32 to vector<4x256xi32>
    %87 = arith.cmpi sge, %85, %86 : vector<4x256xi32>
    %c2_i32_28 = arith.constant 2 : i32
    %88 = vector.broadcast %c2_i32_28 : i32 to vector<4x256xi32>
    %89 = arith.addi %47, %88 : vector<4x256xi32>
    %c16_i32_29 = arith.constant 16 : i32
    %90 = vector.broadcast %c16_i32_29 : i32 to vector<4x256xi32>
    %91 = arith.cmpi slt, %89, %90 : vector<4x256xi32>
    %92 = arith.andi %87, %91 : vector<4x256xi1>
    %c32_i32 = arith.constant 32 : i32
    %93 = vector.broadcast %c32_i32 : i32 to vector<4x256xi32>
    %94 = arith.cmpi sge, %31, %93 : vector<4x256xi32>
    %c288_i32 = arith.constant 288 : i32
    %95 = vector.broadcast %c288_i32 : i32 to vector<4x256xi32>
    %96 = arith.cmpi slt, %31, %95 : vector<4x256xi32>
    %97 = arith.andi %94, %96 : vector<4x256xi1>
    %c16_i32_30 = arith.constant 16 : i32
    %98 = vector.broadcast %c16_i32_30 : i32 to vector<4x256xi32>
    %99 = arith.cmpi sge, %31, %98 : vector<4x256xi32>
    %c272_i32 = arith.constant 272 : i32
    %100 = vector.broadcast %c272_i32 : i32 to vector<4x256xi32>
    %101 = arith.cmpi slt, %31, %100 : vector<4x256xi32>
    %102 = arith.andi %99, %101 : vector<4x256xi1>
    %c0_i32_31 = arith.constant 0 : i32
    %103 = vector.broadcast %c0_i32_31 : i32 to vector<4x256xi32>
    %104 = arith.cmpi sge, %31, %103 : vector<4x256xi32>
    %c256_i32 = arith.constant 256 : i32
    %105 = vector.broadcast %c256_i32 : i32 to vector<4x256xi32>
    %106 = arith.cmpi slt, %31, %105 : vector<4x256xi32>
    %107 = arith.andi %104, %106 : vector<4x256xi1>
    %c-16_i32 = arith.constant -16 : i32
    %108 = vector.broadcast %c-16_i32 : i32 to vector<4x256xi32>
    %109 = arith.cmpi sge, %31, %108 : vector<4x256xi32>
    %c240_i32 = arith.constant 240 : i32
    %110 = vector.broadcast %c240_i32 : i32 to vector<4x256xi32>
    %111 = arith.cmpi slt, %31, %110 : vector<4x256xi32>
    %112 = arith.andi %109, %111 : vector<4x256xi1>
    %c-32_i32 = arith.constant -32 : i32
    %113 = vector.broadcast %c-32_i32 : i32 to vector<4x256xi32>
    %114 = arith.cmpi sge, %31, %113 : vector<4x256xi32>
    %c224_i32 = arith.constant 224 : i32
    %115 = vector.broadcast %c224_i32 : i32 to vector<4x256xi32>
    %116 = arith.cmpi slt, %31, %115 : vector<4x256xi32>
    %117 = arith.andi %114, %116 : vector<4x256xi1>
    %118 = arith.andi %97, %56 : vector<4x256xi1>
    %c34_i32 = arith.constant 34 : i32
    %119 = tpu.dynamic_rotate %30 by %c34_i32 dim 1 : vector<4x256xf32>, i32 -> vector<4x256xf32>
    %cst_32 = arith.constant 0.000000e+00 : f32
    %120 = vector.broadcast %cst_32 : f32 to vector<4x256xf32>
    %121 = arith.select %118, %119, %120 : vector<4x256xi1>, vector<4x256xf32>
    %122 = arith.andi %97, %65 : vector<4x256xi1>
    %c33_i32 = arith.constant 33 : i32
    %123 = tpu.dynamic_rotate %30 by %c33_i32 dim 1 : vector<4x256xf32>, i32 -> vector<4x256xf32>
    %cst_33 = arith.constant 0.000000e+00 : f32
    %124 = vector.broadcast %cst_33 : f32 to vector<4x256xf32>
    %125 = arith.select %122, %123, %124 : vector<4x256xi1>, vector<4x256xf32>
    %126 = arith.andi %97, %74 : vector<4x256xi1>
    %c32_i32_34 = arith.constant 32 : i32
    %127 = tpu.dynamic_rotate %30 by %c32_i32_34 dim 1 : vector<4x256xf32>, i32 -> vector<4x256xf32>
    %cst_35 = arith.constant 0.000000e+00 : f32
    %128 = vector.broadcast %cst_35 : f32 to vector<4x256xf32>
    %129 = arith.select %126, %127, %128 : vector<4x256xi1>, vector<4x256xf32>
    %130 = arith.andi %97, %83 : vector<4x256xi1>
    %c31_i32 = arith.constant 31 : i32
    %131 = tpu.dynamic_rotate %30 by %c31_i32 dim 1 : vector<4x256xf32>, i32 -> vector<4x256xf32>
    %cst_36 = arith.constant 0.000000e+00 : f32
    %132 = vector.broadcast %cst_36 : f32 to vector<4x256xf32>
    %133 = arith.select %130, %131, %132 : vector<4x256xi1>, vector<4x256xf32>
    %134 = tpu.concatenate %121, %125, %129, %133 in 0 : vector<4x256xf32>, vector<4x256xf32>, vector<4x256xf32>, vector<4x256xf32> -> vector<16x256xf32>
    %135 = arith.truncf %134 : vector<16x256xf32> to vector<16x256xbf16>
    %c0_37 = arith.constant 0 : index
    %c0_38 = arith.constant 0 : index
    %136 = vector.load %arg5[%c0_37, %c0_38] : memref<112x256xbf16, #tpu.memory_space<vmem>>, vector<16x256xbf16>
    tpu.vector_store %arg5[%c0_37, %c0_38], %135 {strides = array<i32>} : memref<112x256xbf16, #tpu.memory_space<vmem>>, vector<16x256xbf16>,
    %137 = arith.andi %97, %92 : vector<4x256xi1>
    %c30_i32 = arith.constant 30 : i32
    %138 = tpu.dynamic_rotate %30 by %c30_i32 dim 1 : vector<4x256xf32>, i32 -> vector<4x256xf32>
    %cst_39 = arith.constant 0.000000e+00 : f32
    %139 = vector.broadcast %cst_39 : f32 to vector<4x256xf32>
    %140 = arith.select %137, %138, %139 : vector<4x256xi1>, vector<4x256xf32>
    %141 = arith.andi %102, %56 : vector<4x256xi1>
    %c18_i32 = arith.constant 18 : i32
    %142 = tpu.dynamic_rotate %30 by %c18_i32 dim 1 : vector<4x256xf32>, i32 -> vector<4x256xf32>
    %cst_40 = arith.constant 0.000000e+00 : f32
    %143 = vector.broadcast %cst_40 : f32 to vector<4x256xf32>
    %144 = arith.select %141, %142, %143 : vector<4x256xi1>, vector<4x256xf32>
    %145 = arith.andi %102, %65 : vector<4x256xi1>
    %c17_i32 = arith.constant 17 : i32
    %146 = tpu.dynamic_rotate %30 by %c17_i32 dim 1 : vector<4x256xf32>, i32 -> vector<4x256xf32>
    %cst_41 = arith.constant 0.000000e+00 : f32
    %147 = vector.broadcast %cst_41 : f32 to vector<4x256xf32>
    %148 = arith.select %145, %146, %147 : vector<4x256xi1>, vector<4x256xf32>
    %149 = arith.andi %102, %74 : vector<4x256xi1>
    %c16_i32_42 = arith.constant 16 : i32
    %150 = tpu.dynamic_rotate %30 by %c16_i32_42 dim 1 : vector<4x256xf32>, i32 -> vector<4x256xf32>
    %cst_43 = arith.constant 0.000000e+00 : f32
    %151 = vector.broadcast %cst_43 : f32 to vector<4x256xf32>
    %152 = arith.select %149, %150, %151 : vector<4x256xi1>, vector<4x256xf32>
    %153 = tpu.concatenate %140, %144, %148, %152 in 0 : vector<4x256xf32>, vector<4x256xf32>, vector<4x256xf32>, vector<4x256xf32> -> vector<16x256xf32>
    %154 = arith.truncf %153 : vector<16x256xf32> to vector<16x256xbf16>
    %c16 = arith.constant 16 : index
    %c0_44 = arith.constant 0 : index
    %155 = vector.load %arg5[%c16, %c0_44] : memref<112x256xbf16, #tpu.memory_space<vmem>>, vector<16x256xbf16>
    tpu.vector_store %arg5[%c16, %c0_44], %154 {strides = array<i32>} : memref<112x256xbf16, #tpu.memory_space<vmem>>, vector<16x256xbf16>,
    %156 = arith.andi %102, %83 : vector<4x256xi1>
    %c15_i32 = arith.constant 15 : i32
    %157 = tpu.dynamic_rotate %30 by %c15_i32 dim 1 : vector<4x256xf32>, i32 -> vector<4x256xf32>
    %cst_45 = arith.constant 0.000000e+00 : f32
    %158 = vector.broadcast %cst_45 : f32 to vector<4x256xf32>
    %159 = arith.select %156, %157, %158 : vector<4x256xi1>, vector<4x256xf32>
    %160 = arith.andi %102, %92 : vector<4x256xi1>
    %c14_i32 = arith.constant 14 : i32
    %161 = tpu.dynamic_rotate %30 by %c14_i32 dim 1 : vector<4x256xf32>, i32 -> vector<4x256xf32>
    %cst_46 = arith.constant 0.000000e+00 : f32
    %162 = vector.broadcast %cst_46 : f32 to vector<4x256xf32>
    %163 = arith.select %160, %161, %162 : vector<4x256xi1>, vector<4x256xf32>
    %164 = arith.andi %107, %56 : vector<4x256xi1>
    %c2_i32_47 = arith.constant 2 : i32
    %165 = tpu.dynamic_rotate %30 by %c2_i32_47 dim 1 : vector<4x256xf32>, i32 -> vector<4x256xf32>
    %cst_48 = arith.constant 0.000000e+00 : f32
    %166 = vector.broadcast %cst_48 : f32 to vector<4x256xf32>
    %167 = arith.select %164, %165, %166 : vector<4x256xi1>, vector<4x256xf32>
    %168 = arith.andi %107, %65 : vector<4x256xi1>
    %c1_i32_49 = arith.constant 1 : i32
    %169 = tpu.dynamic_rotate %30 by %c1_i32_49 dim 1 : vector<4x256xf32>, i32 -> vector<4x256xf32>
    %cst_50 = arith.constant 0.000000e+00 : f32
    %170 = vector.broadcast %cst_50 : f32 to vector<4x256xf32>
    %171 = arith.select %168, %169, %170 : vector<4x256xi1>, vector<4x256xf32>
    %172 = tpu.concatenate %159, %163, %167, %171 in 0 : vector<4x256xf32>, vector<4x256xf32>, vector<4x256xf32>, vector<4x256xf32> -> vector<16x256xf32>
    %173 = arith.truncf %172 : vector<16x256xf32> to vector<16x256xbf16>
    %c32 = arith.constant 32 : index
    %c0_51 = arith.constant 0 : index
    %174 = vector.load %arg5[%c32, %c0_51] : memref<112x256xbf16, #tpu.memory_space<vmem>>, vector<16x256xbf16>
    tpu.vector_store %arg5[%c32, %c0_51], %173 {strides = array<i32>} : memref<112x256xbf16, #tpu.memory_space<vmem>>, vector<16x256xbf16>,
    %175 = arith.andi %107, %74 : vector<4x256xi1>
    %cst_52 = arith.constant 0.000000e+00 : f32
    %176 = vector.broadcast %cst_52 : f32 to vector<4x256xf32>
    %177 = arith.select %175, %30, %176 : vector<4x256xi1>, vector<4x256xf32>
    %178 = arith.andi %107, %83 : vector<4x256xi1>
    %c255_i32 = arith.constant 255 : i32
    %179 = tpu.dynamic_rotate %30 by %c255_i32 dim 1 : vector<4x256xf32>, i32 -> vector<4x256xf32>
    %cst_53 = arith.constant 0.000000e+00 : f32
    %180 = vector.broadcast %cst_53 : f32 to vector<4x256xf32>
    %181 = arith.select %178, %179, %180 : vector<4x256xi1>, vector<4x256xf32>
    %182 = arith.andi %107, %92 : vector<4x256xi1>
    %c254_i32 = arith.constant 254 : i32
    %183 = tpu.dynamic_rotate %30 by %c254_i32 dim 1 : vector<4x256xf32>, i32 -> vector<4x256xf32>
    %cst_54 = arith.constant 0.000000e+00 : f32
    %184 = vector.broadcast %cst_54 : f32 to vector<4x256xf32>
    %185 = arith.select %182, %183, %184 : vector<4x256xi1>, vector<4x256xf32>
    %186 = arith.andi %112, %56 : vector<4x256xi1>
    %c242_i32 = arith.constant 242 : i32
    %187 = tpu.dynamic_rotate %30 by %c242_i32 dim 1 : vector<4x256xf32>, i32 -> vector<4x256xf32>
    %cst_55 = arith.constant 0.000000e+00 : f32
    %188 = vector.broadcast %cst_55 : f32 to vector<4x256xf32>
    %189 = arith.select %186, %187, %188 : vector<4x256xi1>, vector<4x256xf32>
    %190 = tpu.concatenate %177, %181, %185, %189 in 0 : vector<4x256xf32>, vector<4x256xf32>, vector<4x256xf32>, vector<4x256xf32> -> vector<16x256xf32>
    %191 = arith.truncf %190 : vector<16x256xf32> to vector<16x256xbf16>
    %c48 = arith.constant 48 : index
    %c0_56 = arith.constant 0 : index
    %192 = vector.load %arg5[%c48, %c0_56] : memref<112x256xbf16, #tpu.memory_space<vmem>>, vector<16x256xbf16>
    tpu.vector_store %arg5[%c48, %c0_56], %191 {strides = array<i32>} : memref<112x256xbf16, #tpu.memory_space<vmem>>, vector<16x256xbf16>,
    %193 = arith.andi %112, %65 : vector<4x256xi1>
    %c241_i32 = arith.constant 241 : i32
    %194 = tpu.dynamic_rotate %30 by %c241_i32 dim 1 : vector<4x256xf32>, i32 -> vector<4x256xf32>
    %cst_57 = arith.constant 0.000000e+00 : f32
    %195 = vector.broadcast %cst_57 : f32 to vector<4x256xf32>
    %196 = arith.select %193, %194, %195 : vector<4x256xi1>, vector<4x256xf32>
    %197 = arith.andi %112, %74 : vector<4x256xi1>
    %c240_i32_58 = arith.constant 240 : i32
    %198 = tpu.dynamic_rotate %30 by %c240_i32_58 dim 1 : vector<4x256xf32>, i32 -> vector<4x256xf32>
    %cst_59 = arith.constant 0.000000e+00 : f32
    %199 = vector.broadcast %cst_59 : f32 to vector<4x256xf32>
    %200 = arith.select %197, %198, %199 : vector<4x256xi1>, vector<4x256xf32>
    %201 = arith.andi %112, %83 : vector<4x256xi1>
    %c239_i32 = arith.constant 239 : i32
    %202 = tpu.dynamic_rotate %30 by %c239_i32 dim 1 : vector<4x256xf32>, i32 -> vector<4x256xf32>
    %cst_60 = arith.constant 0.000000e+00 : f32
    %203 = vector.broadcast %cst_60 : f32 to vector<4x256xf32>
    %204 = arith.select %201, %202, %203 : vector<4x256xi1>, vector<4x256xf32>
    %205 = arith.andi %112, %92 : vector<4x256xi1>
    %c238_i32 = arith.constant 238 : i32
    %206 = tpu.dynamic_rotate %30 by %c238_i32 dim 1 : vector<4x256xf32>, i32 -> vector<4x256xf32>
    %cst_61 = arith.constant 0.000000e+00 : f32
    %207 = vector.broadcast %cst_61 : f32 to vector<4x256xf32>
    %208 = arith.select %205, %206, %207 : vector<4x256xi1>, vector<4x256xf32>
    %209 = tpu.concatenate %196, %200, %204, %208 in 0 : vector<4x256xf32>, vector<4x256xf32>, vector<4x256xf32>, vector<4x256xf32> -> vector<16x256xf32>
    %210 = arith.truncf %209 : vector<16x256xf32> to vector<16x256xbf16>
    %c64 = arith.constant 64 : index
    %c0_62 = arith.constant 0 : index
    %211 = vector.load %arg5[%c64, %c0_62] : memref<112x256xbf16, #tpu.memory_space<vmem>>, vector<16x256xbf16>
    tpu.vector_store %arg5[%c64, %c0_62], %210 {strides = array<i32>} : memref<112x256xbf16, #tpu.memory_space<vmem>>, vector<16x256xbf16>,
    %212 = arith.andi %117, %56 : vector<4x256xi1>
    %c226_i32 = arith.constant 226 : i32
    %213 = tpu.dynamic_rotate %30 by %c226_i32 dim 1 : vector<4x256xf32>, i32 -> vector<4x256xf32>
    %cst_63 = arith.constant 0.000000e+00 : f32
    %214 = vector.broadcast %cst_63 : f32 to vector<4x256xf32>
    %215 = arith.select %212, %213, %214 : vector<4x256xi1>, vector<4x256xf32>
    %216 = arith.andi %117, %65 : vector<4x256xi1>
    %c225_i32 = arith.constant 225 : i32
    %217 = tpu.dynamic_rotate %30 by %c225_i32 dim 1 : vector<4x256xf32>, i32 -> vector<4x256xf32>
    %cst_64 = arith.constant 0.000000e+00 : f32
    %218 = vector.broadcast %cst_64 : f32 to vector<4x256xf32>
    %219 = arith.select %216, %217, %218 : vector<4x256xi1>, vector<4x256xf32>
    %220 = arith.andi %117, %74 : vector<4x256xi1>
    %c224_i32_65 = arith.constant 224 : i32
    %221 = tpu.dynamic_rotate %30 by %c224_i32_65 dim 1 : vector<4x256xf32>, i32 -> vector<4x256xf32>
    %cst_66 = arith.constant 0.000000e+00 : f32
    %222 = vector.broadcast %cst_66 : f32 to vector<4x256xf32>
    %223 = arith.select %220, %221, %222 : vector<4x256xi1>, vector<4x256xf32>
    %224 = arith.andi %117, %83 : vector<4x256xi1>
    %c223_i32 = arith.constant 223 : i32
    %225 = tpu.dynamic_rotate %30 by %c223_i32 dim 1 : vector<4x256xf32>, i32 -> vector<4x256xf32>
    %cst_67 = arith.constant 0.000000e+00 : f32
    %226 = vector.broadcast %cst_67 : f32 to vector<4x256xf32>
    %227 = arith.select %224, %225, %226 : vector<4x256xi1>, vector<4x256xf32>
    %228 = tpu.concatenate %215, %219, %223, %227 in 0 : vector<4x256xf32>, vector<4x256xf32>, vector<4x256xf32>, vector<4x256xf32> -> vector<16x256xf32>
    %229 = arith.truncf %228 : vector<16x256xf32> to vector<16x256xbf16>
    %c80 = arith.constant 80 : index
    %c0_68 = arith.constant 0 : index
    %230 = vector.load %arg5[%c80, %c0_68] : memref<112x256xbf16, #tpu.memory_space<vmem>>, vector<16x256xbf16>
    tpu.vector_store %arg5[%c80, %c0_68], %229 {strides = array<i32>} : memref<112x256xbf16, #tpu.memory_space<vmem>>, vector<16x256xbf16>,
    %231 = arith.andi %117, %92 : vector<4x256xi1>
    %c222_i32 = arith.constant 222 : i32
    %232 = tpu.dynamic_rotate %30 by %c222_i32 dim 1 : vector<4x256xf32>, i32 -> vector<4x256xf32>
    %cst_69 = arith.constant 0.000000e+00 : f32
    %233 = vector.broadcast %cst_69 : f32 to vector<4x256xf32>
    %234 = arith.select %231, %232, %233 : vector<4x256xi1>, vector<4x256xf32>
    %cst_70 = arith.constant 0.000000e+00 : f32
    %235 = vector.broadcast %cst_70 : f32 to vector<4x256xf32>
    %cst_71 = arith.constant 0.000000e+00 : f32
    %236 = vector.broadcast %cst_71 : f32 to vector<4x256xf32>
    %cst_72 = arith.constant 0.000000e+00 : f32
    %237 = vector.broadcast %cst_72 : f32 to vector<4x256xf32>
    %238 = tpu.concatenate %234, %235, %236, %237 in 0 : vector<4x256xf32>, vector<4x256xf32>, vector<4x256xf32>, vector<4x256xf32> -> vector<16x256xf32>
    %239 = arith.truncf %238 : vector<16x256xf32> to vector<16x256xbf16>
    %c96 = arith.constant 96 : index
    %c0_73 = arith.constant 0 : index
    %240 = vector.load %arg5[%c96, %c0_73] : memref<112x256xbf16, #tpu.memory_space<vmem>>, vector<16x256xbf16>
    tpu.vector_store %arg5[%c96, %c0_73], %239 {strides = array<i32>} : memref<112x256xbf16, #tpu.memory_space<vmem>>, vector<16x256xbf16>,
    %c0_74 = arith.constant 0 : index
    %c0_75 = arith.constant 0 : index
    %241 = vector.load %arg2[%c0_74, %c0_75] : memref<16x112xbf16, #tpu.memory_space<vmem>>, vector<16x112xbf16>
    %c0_76 = arith.constant 0 : index
    %c0_77 = arith.constant 0 : index
    %242 = vector.load %arg5[%c0_76, %c0_77] : memref<112x256xbf16, #tpu.memory_space<vmem>>, vector<112x256xbf16>
    %cst_78 = arith.constant dense<0.000000e+00> : vector<16x256xf32>
    %243 = tpu.matmul %241, %242, %cst_78 {dimension_numbers = #tpu.dot_dimension_numbers<[1], [0], [0], [1], [0, 0, 1, 1], [], []>} : vector<16x112xbf16>, vector<112x256xbf16>, vector<16x256xf32> -> vector<16x256xf32>
    %cst_79 = arith.constant dense<0.000000e+00> : vector<16xf32>
    %244 = vector.multi_reduction <add>, %243, %cst_79 [1] : vector<16x256xf32> to vector<16xf32>
    %245 = vector.shape_cast %244 : vector<16xf32> to vector<16x1xf32>
    %cst_80 = arith.constant 3.906250e-03 : f32
    %246 = vector.broadcast %cst_80 : f32 to vector<16x1xf32>
    %247 = arith.mulf %245, %246 : vector<16x1xf32>
    %248 = vector.broadcast %247 : vector<16x1xf32> to vector<16x256xf32>
    %249 = arith.subf %243, %248 : vector<16x256xf32>
    %250 = arith.mulf %249, %249 : vector<16x256xf32>
    %cst_81 = arith.constant dense<0.000000e+00> : vector<16xf32>
    %251 = vector.multi_reduction <add>, %250, %cst_81 [1] : vector<16x256xf32> to vector<16xf32>
    %252 = vector.shape_cast %251 : vector<16xf32> to vector<16x1xf32>
    %cst_82 = arith.constant 3.906250e-03 : f32
    %253 = vector.broadcast %cst_82 : f32 to vector<16x1xf32>
    %254 = arith.mulf %252, %253 : vector<16x1xf32>
    %cst_83 = arith.constant 9.99999974E-6 : f32
    %255 = vector.broadcast %cst_83 : f32 to vector<16x1xf32>
    %256 = arith.addf %254, %255 : vector<16x1xf32>
    %257 = math.rsqrt %256 : vector<16x1xf32>
    %258 = vector.broadcast %257 : vector<16x1xf32> to vector<16x256xf32>
    %259 = arith.mulf %249, %258 : vector<16x256xf32>
    %260 = arith.mulf %259, %259 : vector<16x256xf32>
    %261 = arith.mulf %259, %260 : vector<16x256xf32>
    %cst_84 = arith.constant 4.471500e-02 : f32
    %262 = vector.broadcast %cst_84 : f32 to vector<16x256xf32>
    %263 = arith.mulf %262, %261 : vector<16x256xf32>
    %264 = arith.addf %259, %263 : vector<16x256xf32>
    %cst_85 = arith.constant 0.797884583 : f32
    %265 = vector.broadcast %cst_85 : f32 to vector<16x256xf32>
    %266 = arith.mulf %265, %264 : vector<16x256xf32>
    %267 = math.tanh %266 : vector<16x256xf32>
    %cst_86 = arith.constant 1.000000e+00 : f32
    %268 = vector.broadcast %cst_86 : f32 to vector<16x256xf32>
    %269 = arith.addf %268, %267 : vector<16x256xf32>
    %cst_87 = arith.constant 5.000000e-01 : f32
    %270 = vector.broadcast %cst_87 : f32 to vector<16x256xf32>
    %271 = arith.mulf %270, %269 : vector<16x256xf32>
    %272 = arith.mulf %259, %271 : vector<16x256xf32>
    %273 = arith.truncf %272 : vector<16x256xf32> to vector<16x256xbf16>
    %c0_88 = arith.constant 0 : index
    %c0_89 = arith.constant 0 : index
    %274 = vector.load %arg3[%c0_88, %c0_89] : memref<16x16xbf16, #tpu.memory_space<vmem>>, vector<16x16xbf16>
    %cst_90 = arith.constant dense<0.000000e+00> : vector<16x256xf32>
    %275 = tpu.matmul %274, %273, %cst_90 {dimension_numbers = #tpu.dot_dimension_numbers<[1], [0], [0], [1], [0, 0, 1, 1], [], []>} : vector<16x16xbf16>, vector<16x256xbf16>, vector<16x256xf32> -> vector<16x256xf32>
    %c0_91 = arith.constant 0 : index
    %c0_92 = arith.constant 0 : index
    %c0_93 = arith.constant 0 : index
    %276 = vector.load %arg4[%c0_91, %c0_92, %c0_93] : memref<1x16x256xf32, #tpu.memory_space<vmem>>, vector<1x16x256xf32>
    %277 = vector.shape_cast %276 : vector<1x16x256xf32> to vector<16x256xf32>
    %278 = vector.shape_cast %275 : vector<16x256xf32> to vector<1x16x256xf32>
    tpu.vector_store %arg4[%c0_91, %c0_92, %c0_93], %278 {strides = array<i32>} : memref<1x16x256xf32, #tpu.memory_space<vmem>>, vector<1x16x256xf32>,
    return
  }
  func.func @transform_0(%arg0: i32) -> (i32, i32, i32) {
    %c0_i32 = arith.constant 0 : i32
    %c0_i32_0 = arith.constant 0 : i32
    %c0_i32_1 = arith.constant 0 : i32
    return %arg0, %c0_i32, %c0_i32_0 : i32, i32, i32
  }
  func.func @transform_1(%arg0: i32) -> (i32, i32) {
    %c0_i32 = arith.constant 0 : i32
    %c0_i32_0 = arith.constant 0 : i32
    %c0_i32_1 = arith.constant 0 : i32
    return %c0_i32, %c0_i32_0 : i32, i32
  }
  func.func @transform_2(%arg0: i32) -> (i32, i32) {
    %c0_i32 = arith.constant 0 : i32
    %c0_i32_0 = arith.constant 0 : i32
    %c0_i32_1 = arith.constant 0 : i32
    return %c0_i32, %c0_i32_0 : i32, i32
  }
  func.func @transform_3(%arg0: i32) -> (i32, i32, i32) {
    %c0_i32 = arith.constant 0 : i32
    %c0_i32_0 = arith.constant 0 : i32
    %c0_i32_1 = arith.constant 0 : i32
    return %arg0, %c0_i32, %c0_i32_0 : i32, i32, i32
  }
}

</mosaic_0001>

<llo_original>
// kernel: decoder_forward.1
$region0: #{decoder_forward.1}
  #allocation0 [shape = 'u32[]', space=smem, size = 0x4, offset = 0x4, fixed_abs, tag = 'smem constant byte address 0x4 - core index']
  #allocation1 [shape = 'u32[144,128]{1,0:T(1,128)}', space=vmem, size = 0x12000, scoped, tag = 'internal scratch']
  #allocation2 [shape = 'bf16[112,256]{1,0:T(16,128)(2,1)}', space=vmem, size = 0xe000, scoped, tag = 'scratch operand']
  %s0 = inlined_call_operand.vmem [shape: f32[2,4,256], index: 0, kind: input, shape index: {}]
  %s1 = inlined_call_operand.vmem [shape: bf16[16,112], index: 1, kind: input, shape index: {}]
  %s2 = inlined_call_operand.vmem [shape: bf16[16,16], index: 2, kind: input, shape index: {}]
  %s3 = inlined_call_operand.vmem [shape: f32[2,16,256], index: 3, kind: output, shape index: {}]
  %s4 = sld [smem:[#allocation0]]
  $region45: #{decoder_forward.1} parent=0
    _
  %s6 = ssub.s32 1, %s4
  %s7 = scalar_select 0, %s6, %s4
  loop: start=0, step=1, limit=4
  $region2: #{decoder_forward.1} parent=0 // loop_pre_header
    _
  $region3: #{decoder_forward.1} parent=0 // loop_header
    %s9 = sphi 0, %s13
    %p10 = scmp.ge.s32.totalorder %s9, 4
    %s19 = sphi 0, %s21
    %s22 = sphi 0, %s19
    %s23 = sphi 0, %s22
    %s39 = sphi 0, %s23
    %s43 = sphi 0, %s43
    %s45 = sphi 0, %s43
    %s46 = sphi 0, %s45
    %s60 = sphi 0, %s46
    %s64 = sphi 0, %s64
    %s66 = sphi 0, %s64
    %s67 = sphi 0, %s66
    %s81 = sphi 0, %s67
    %s87 = sphi 0, %s89
    %s90 = sphi 0, %s87
    %s91 = sphi 0, %s90
    %s107 = sphi 0, %s91
  $region4: #{decoder_forward.1} parent=0 // loop_header_branch
    %12 = sbr.rel (%p10) target = $region8
  $region5: #{decoder_forward.1} parent=0 // loop_body
    %s14 = ssub.s32 %s9, 1
    %s15 = ssub.s32 %s9, 2
    %s16 = sadd.s32 %s9, 1
    %s17 = ssub.s32 %s9, %s16
    %p18 = scmp.eq.s32.totalorder %s17, 0
    %s20 = sadd.s32 %s19, 1
    %s21 = scalar_select %p18, %s19, %s20
    %p24 = pneg %p18
    %p25 = scmp.eq.s32.totalorder %s9, 1
    %p26 = por %p24, %p25
    %p27 = scmp.ne.s32.totalorder %s19, %s22
    %p28 = scmp.eq.s32.totalorder %s9, 0
    %p29 = por %p27, %p28
    %p30 = scmp.ne.s32.totalorder %s19, %s22
    %p31 = scmp.eq.s32.totalorder %s14, 1
    %p32 = por %p30, %p31
    %p33 = scmp.ne.s32.totalorder %s22, %s23
    %p34 = scmp.eq.s32.totalorder %s14, 0
    %p35 = por %p33, %p34
    %p36 = scmp.ne.s32.totalorder %s22, %s23
    %p37 = scmp.eq.s32.totalorder %s15, 1
    %p38 = por %p36, %p37
    %p40 = scmp.ne.s32.totalorder %s23, %s39
    %p41 = scmp.eq.s32.totalorder %s15, 0
    %p42 = por %p40, %p41
    %s44 = sadd.s32 %s43, 1
    %p47 = scmp.eq.s32.totalorder %s9, 1
    %p48 = scmp.ne.s32.totalorder %s43, %s45
    %p49 = scmp.eq.s32.totalorder %s9, 0
    %p50 = por %p48, %p49
    %p51 = scmp.ne.s32.totalorder %s43, %s45
    %p52 = scmp.eq.s32.totalorder %s14, 1
    %p53 = por %p51, %p52
    %p54 = scmp.ne.s32.totalorder %s45, %s46
    %p55 = scmp.eq.s32.totalorder %s14, 0
    %p56 = por %p54, %p55
    %p57 = scmp.ne.s32.totalorder %s45, %s46
    %p58 = scmp.eq.s32.totalorder %s15, 1
    %p59 = por %p57, %p58
    %p61 = scmp.ne.s32.totalorder %s46, %s60
    %p62 = scmp.eq.s32.totalorder %s15, 0
    %p63 = por %p61, %p62
    %s65 = sadd.s32 %s64, 1
    %p68 = scmp.eq.s32.totalorder %s9, 1
    %p69 = scmp.ne.s32.totalorder %s64, %s66
    %p70 = scmp.eq.s32.totalorder %s9, 0
    %p71 = por %p69, %p70
    %p72 = scmp.ne.s32.totalorder %s64, %s66
    %p73 = scmp.eq.s32.totalorder %s14, 1
    %p74 = por %p72, %p73
    %p75 = scmp.ne.s32.totalorder %s66, %s67
    %p76 = scmp.eq.s32.totalorder %s14, 0
    %p77 = por %p75, %p76
    %p78 = scmp.ne.s32.totalorder %s66, %s67
    %p79 = scmp.eq.s32.totalorder %s15, 1
    %p80 = por %p78, %p79
    %p82 = scmp.ne.s32.totalorder %s67, %s81
    %p83 = scmp.eq.s32.totalorder %s15, 0
    %p84 = por %p82, %p83
    %s85 = ssub.s32 %s9, %s16
    %p86 = scmp.eq.s32.totalorder %s85, 0
    %s88 = sadd.s32 %s87, 1
    %s89 = scalar_select %p86, %s87, %s88
    %p92 = pneg %p86
    %p93 = scmp.eq.s32.totalorder %s9, 1
    %p94 = por %p92, %p93
    %p95 = scmp.ne.s32.totalorder %s87, %s90
    %p96 = scmp.eq.s32.totalorder %s9, 0
    %p97 = por %p95, %p96
    %p98 = scmp.ne.s32.totalorder %s87, %s90
    %p99 = scmp.eq.s32.totalorder %s14, 1
    %p100 = por %p98, %p99
    %p101 = scmp.ne.s32.totalorder %s90, %s91
    %p102 = scmp.eq.s32.totalorder %s14, 0
    %p103 = por %p101, %p102
    %p104 = scmp.ne.s32.totalorder %s90, %s91
    %p105 = scmp.eq.s32.totalorder %s15, 1
    %p106 = por %p104, %p105
    %p108 = scmp.ne.s32.totalorder %s91, %s107
    %p109 = scmp.eq.s32.totalorder %s15, 0
    %p110 = por %p108, %p109
    %p111 = scmp.le.s32.totalorder 1, %s9
    %p112 = scmp.lt.s32.totalorder %s9, 3
    %p113 = pnand %p111, %p112
    %p114 = pneg %p113
    // Predicated region
    $region9: #{decoder_forward.1} parent=5 // pred_check
      _
    $region10: #{decoder_forward.1} parent=5 // pred_check_branch
      %116 = sbr.rel (%p113) target = $region12
    $region11: #{decoder_forward.1} parent=5 // pred_region
      %s117 = ssub.s32 %s9, 1
      // Predicated region
      $region13: #{decoder_forward.1} parent=11 // pred_check
        %p118 = pneg %p56
      $region14: #{decoder_forward.1} parent=11 // pred_check_branch
        %120 = sbr.rel (%p118) target = $region16
      $region15: #{decoder_forward.1} parent=11 // pred_region
        _
      $region16: #{decoder_forward.1} parent=11 // pred_fallthru
        _
      // Predicated region
      $region17: #{decoder_forward.1} parent=11 // pred_check
        %p121 = pneg %p77
      $region18: #{decoder_forward.1} parent=11 // pred_check_branch
        %123 = sbr.rel (%p121) target = $region20
      $region19: #{decoder_forward.1} parent=11 // pred_region
        _
      $region20: #{decoder_forward.1} parent=11 // pred_fallthru
        _
    $region12: #{decoder_forward.1} parent=5 // pred_fallthru
      _
    %p124 = scmp.lt.s32.totalorder %s9, 2
    // Predicated region
    $region21: #{decoder_forward.1} parent=5 // pred_check
      %p125 = pneg %p124
    $region22: #{decoder_forward.1} parent=5 // pred_check_branch
      %127 = sbr.rel (%p125) target = $region24
    $region23: #{decoder_forward.1} parent=5 // pred_region
      // Predicated region
      $region25: #{decoder_forward.1} parent=23 // pred_check
        %p128 = pneg %p29
      $region26: #{decoder_forward.1} parent=23 // pred_check_branch
        %130 = sbr.rel (%p128) target = $region28
      $region27: #{decoder_forward.1} parent=23 // pred_region
        %p131 = scmp.lt.s32.totalorder %s9, 1
        %s132 = scalar_select %p131, %s9, 1
        %s133 = smul.addr %s132, 2
        %s134 = smul.addr %s133, 4
        %s135 = scalar_lea.vmem %s0, %s134
      $region28: #{decoder_forward.1} parent=23 // pred_fallthru
        _
    $region24: #{decoder_forward.1} parent=5 // pred_fallthru
      _
    %p136 = scmp.le.s32.totalorder 1, %s9
    %p137 = scmp.lt.s32.totalorder %s9, 3
    %p138 = pnand %p136, %p137
    %p139 = pneg %p138
    // Predicated region
    $region29: #{decoder_forward.1} parent=5 // pred_check
      _
    $region30: #{decoder_forward.1} parent=5 // pred_check_branch
      %141 = sbr.rel (%p138) target = $region32
    $region31: #{decoder_forward.1} parent=5 // pred_region
      %s142 = ssub.s32 %s9, 1
      %p143 = scmp.lt.s32.totalorder %s14, 1
      %s144 = scalar_select %p143, %s14, 1
      %s145 = smul.addr %s144, 2
      %s146 = smul.addr %s145, 4
      %s147 = scalar_lea.vmem %s0, %s146
      %p148 = pneg %p35
      %p149 = pneg %p32
      %p150 = pneg %p56
      %p151 = pneg %p53
      %p152 = pneg %p77
      %p153 = pneg %p74
      %p154 = pneg %p103
      %p155 = pneg %p100
      %p156 = scmp.lt.s32.totalorder %s14, 1
      %s157 = scalar_select %p156, %s14, 1
      %s158 = smul.addr %s157, 4
      %s159 = smul.addr %s158, 8
      %s160 = scalar_lea.vmem %s3, %s159
      %p161 = scmp.lt.s32.totalorder %s14, 1
      %s162 = scalar_select %p161, %s14, 1
      %s163 = smul.addr %s162, 2
      %s164 = smul.addr %s163, 4
      %s165 = scalar_lea.vmem %s0, %s164
      %p166 = scmp.lt.s32.totalorder %s14, 1
      %s167 = scalar_select %p166, %s14, 1
      %s168 = smul.addr %s167, 4
      %s169 = smul.addr %s168, 8
      %s170 = scalar_lea.vmem %s3, %s169
      %v172 = vld [vmem:[%s165] sm:$0xff]
      %v174 = vcombine.high %v172, %v172
      %vm176 = vcmask 1043456
      %v177 = vsel %vm176, %v172, 0.0
      %v178 = vsel %vm176, %v174, 0.0
      %v179 = vadd.f32 %v177, %v178
      %180 = vadd.xlane.f32.xlu0 %v179
      %v181 = vpop.xlane.xlu0 %180
      %v182 = vmul.f32 %v181, 0.00390625
      %v185 = vunpack.c.l.s4 839922192
      %v186 = vunpack.c.0.s8 %v185
      %v187 = vlaneseq
      %v188 = vshrl.u32 %v187, 7
      %v189 = vsub.s32 %v186, %v188
      %v190 = vrot.slane %v182, %v189
      %v192 = vsub.f32 %v172, %v190
      %v193 = vmul.f32 %v192, %v192
      %v195 = vcombine.high %v193, %v193
      %v197 = vsel %vm176, %v193, 0.0
      %v198 = vsel %vm176, %v195, 0.0
      %v199 = vadd.f32 %v197, %v198
      %200 = vadd.xlane.f32.xlu0 %v199
      %v201 = vpop.xlane.xlu0 %200
      %v202 = vmul.f32 %v201, 0.00390625
      %v203 = vadd.f32 %v202, 1e-05
      %v204 = vrsqrt.pop %v203
      %v207 = vunpack.c.l.s4 839922192
      %v208 = vunpack.c.0.s8 %v207
      %v209 = vlaneseq
      %v210 = vshrl.u32 %v209, 7
      %v211 = vsub.s32 %v208, %v210
      %v212 = vrot.slane %v204, %v211
      %v214 = vmul.f32 %v192, %v212
      %v215 = vmul.f32 %v214, %v214
      %v216 = vmul.f32 %v214, %v215
      %v217 = vmul.f32 %v216, 0.044715
      %v218 = vadd.f32 %v214, %v217
      %v219 = vmul.f32 %v218, 0.7978846
      %v220 = vtanh.pop %v219
      %v221 = vadd.f32 %v220, 1.0
      %v222 = vmul.f32 %v221, 0.5
      %v223 = vmul.f32 %v214, %v222
      %v224 = vlaneseq
      %v225 = vand.u32 %v224, 127
      %v226 = vadd.s32 %v225, 128
      %vm227 = vcmp.lt.s32.totalorder %v225, 0
      %v228 = vsub.s32 0, %v225
      %v229 = vsel %vm227, %v228, %v225
      %v230 = vshrl.u32 %v229, 4
      %v231 = vand.u32 %v229, 15
      %v232 = vsub.s32 0, %v231
      %v233 = vsel %vm227, %v232, %v231
      %vm234 = vcmp.lt.s32.totalorder %v226, 0
      %v235 = vsub.s32 0, %v226
      %v236 = vsel %vm234, %v235, %v226
      %v237 = vshrl.u32 %v236, 4
      %v238 = vand.u32 %v236, 15
      %v239 = vsub.s32 0, %v238
      %v240 = vsel %vm234, %v239, %v238
      %vm241 = vcmp.ne.s32.totalorder %v233, 0
      %vm242 = vcmp.ne.s32.totalorder %v240, 0
      %vm243 = vcmp.lt.s32.totalorder %v233, 0
      %vm244 = vcmp.lt.s32.totalorder %v240, 0
      %vm245 = vmand %vm243, %vm241
      %vm246 = vmand %vm244, %vm242
      %v247 = vadd.s32 %v233, 16
      %v248 = vadd.s32 %v240, 16
      %v249 = vsel %vm245, %v247, %v233
      %v250 = vsel %vm246, %v248, %v240
      %v251 = vadd.s32 %v249, 4294967294
      %v252 = vadd.s32 %v250, 4294967294
      %vm253 = vcmp.ge.s32.totalorder %v251, 0
      %vm254 = vcmp.ge.s32.totalorder %v252, 0
      %vm255 = vcmp.lt.s32.totalorder %v251, 16
      %vm256 = vcmp.lt.s32.totalorder %v252, 16
      %vm257 = vmand %vm253, %vm255
      %vm258 = vmand %vm254, %vm256
      %v259 = vadd.s32 %v249, 4294967295
      %v260 = vadd.s32 %v250, 4294967295
      %vm261 = vcmp.ge.s32.totalorder %v259, 0
      %vm262 = vcmp.ge.s32.totalorder %v260, 0
      %vm263 = vcmp.lt.s32.totalorder %v259, 16
      %vm264 = vcmp.lt.s32.totalorder %v260, 16
      %vm265 = vmand %vm261, %vm263
      %vm266 = vmand %vm262, %vm264
      %vm267 = vcmp.ge.s32.totalorder %v249, 0
      %vm268 = vcmp.ge.s32.totalorder %v250, 0
      %vm269 = vcmp.lt.s32.totalorder %v249, 16
      %vm270 = vcmp.lt.s32.totalorder %v250, 16
      %vm271 = vmand %vm267, %vm269
      %vm272 = vmand %vm268, %vm270
      %v273 = vadd.s32 %v249, 1
      %v274 = vadd.s32 %v250, 1
      %vm275 = vcmp.ge.s32.totalorder %v273, 0
      %vm276 = vcmp.ge.s32.totalorder %v274, 0
      %vm277 = vcmp.lt.s32.totalorder %v273, 16
      %vm278 = vcmp.lt.s32.totalorder %v274, 16
      %vm279 = vmand %vm275, %vm277
      %vm280 = vmand %vm276, %vm278
      %v281 = vadd.s32 %v249, 2
      %v282 = vadd.s32 %v250, 2
      %vm283 = vcmp.ge.s32.totalorder %v281, 0
      %vm284 = vcmp.ge.s32.totalorder %v282, 0
      %vm285 = vcmp.lt.s32.totalorder %v281, 16
      %vm286 = vcmp.lt.s32.totalorder %v282, 16
      %vm287 = vmand %vm283, %vm285
      %vm288 = vmand %vm284, %vm286
      %vm289 = vcmp.ge.s32.totalorder %v225, 32
      %vm290 = vcmp.ge.s32.totalorder %v226, 32
      %vm291 = vcmp.lt.s32.totalorder %v225, 288
      %vm292 = vcmp.lt.s32.totalorder %v226, 288
      %vm293 = vmand %vm289, %vm291
      %vm294 = vmand %vm290, %vm292
      %vm295 = vcmp.ge.s32.totalorder %v225, 16
      %vm296 = vcmp.ge.s32.totalorder %v226, 16
      %vm297 = vcmp.lt.s32.totalorder %v225, 272
      %vm298 = vcmp.lt.s32.totalorder %v226, 272
      %vm299 = vmand %vm295, %vm297
      %vm300 = vmand %vm296, %vm298
      %vm301 = vcmp.ge.s32.totalorder %v225, 0
      %vm302 = vcmp.ge.s32.totalorder %v226, 0
      %vm303 = vcmp.lt.s32.totalorder %v225, 256
      %vm304 = vcmp.lt.s32.totalorder %v226, 256
      %vm305 = vmand %vm301, %vm303
      %vm306 = vmand %vm302, %vm304
      %vm307 = vcmp.ge.s32.totalorder %v225, 4294967280
      %vm308 = vcmp.ge.s32.totalorder %v226, 4294967280
      %vm309 = vcmp.lt.s32.totalorder %v225, 240
      %vm310 = vcmp.lt.s32.totalorder %v226, 240
      %vm311 = vmand %vm307, %vm309
      %vm312 = vmand %vm308, %vm310
      %vm313 = vcmp.ge.s32.totalorder %v225, 4294967264
      %vm314 = vcmp.ge.s32.totalorder %v226, 4294967264
      %vm315 = vcmp.lt.s32.totalorder %v225, 224
      %vm316 = vcmp.lt.s32.totalorder %v226, 224
      %vm317 = vmand %vm313, %vm315
      %vm318 = vmand %vm314, %vm316
      %vm319 = vmand %vm293, %vm257
      %vm320 = vmand %vm294, %vm258
      %v322 = vcombine.high %v223, %v223
      %324 = vrot.lane.b32.xlu0 %v223, 34
      %v325 = vpop.permute.xlu0 %324
      %326 = vrot.lane.b32.xlu0 %v322, 34
      %v327 = vpop.permute.xlu0 %326
      %vm328 = vcmp.lt.s32.totalorder %v225, 34
      %v329 = vsel %vm328, %v325, %v327
      %v330 = vsel %vm328, %v327, %v325
      %v331 = vsel %vm319, %v330, 0.0
      %v332 = vsel %vm320, %v329, 0.0
      %vm333 = vmand %vm293, %vm265
      %vm334 = vmand %vm294, %vm266
      %335 = vrot.lane.b32.xlu0 %v223, 33
      %v336 = vpop.permute.xlu0 %335
      %337 = vrot.lane.b32.xlu0 %v322, 33
      %v338 = vpop.permute.xlu0 %337
      %vm339 = vcmp.lt.s32.totalorder %v225, 33
      %v340 = vsel %vm339, %v336, %v338
      %v341 = vsel %vm339, %v338, %v336
      %v342 = vsel %vm333, %v341, 0.0
      %v343 = vsel %vm334, %v340, 0.0
      %vm344 = vmand %vm293, %vm271
      %vm345 = vmand %vm294, %vm272
      %346 = vrot.lane.b32.xlu0 %v223, 32
      %v347 = vpop.permute.xlu0 %346
      %348 = vrot.lane.b32.xlu0 %v322, 32
      %v349 = vpop.permute.xlu0 %348
      %vm350 = vcmp.lt.s32.totalorder %v225, 32
      %v351 = vsel %vm350, %v347, %v349
      %v352 = vsel %vm350, %v349, %v347
      %v353 = vsel %vm344, %v352, 0.0
      %v354 = vsel %vm345, %v351, 0.0
      %vm355 = vmand %vm293, %vm279
      %vm356 = vmand %vm294, %vm280
      %357 = vrot.lane.b32.xlu0 %v223, 31
      %v358 = vpop.permute.xlu0 %357
      %359 = vrot.lane.b32.xlu0 %v322, 31
      %v360 = vpop.permute.xlu0 %359
      %vm361 = vcmp.lt.s32.totalorder %v225, 31
      %v362 = vsel %vm361, %v358, %v360
      %v363 = vsel %vm361, %v360, %v358
      %v364 = vsel %vm355, %v363, 0.0
      %v365 = vsel %vm356, %v362, 0.0
      %v368 = vrot.slane %v342, 4
      %v369 = vrot.slane %v343, 4
      %v374 = vrot.slane %v364, 4
      %v375 = vrot.slane %v365, 4
      %v378 = vsel %vm176, %v331, %v368
      %v379 = vsel %vm176, %v332, %v369
      %v380 = vsel %vm176, %v353, %v374
      %v381 = vsel %vm176, %v354, %v375
      %v382 = vpack.c.bf16 %v380, %v378
      %v383 = vpack.c.bf16 %v381, %v379
      %384 = vst [vmem:[#allocation2] sm:$0xff] %v382
      %385 = vst [vmem:[#allocation2 + $0x8] sm:$0xff] %v383
      %vm386 = vmand %vm293, %vm287
      %vm387 = vmand %vm294, %vm288
      %388 = vrot.lane.b32.xlu0 %v223, 30
      %v389 = vpop.permute.xlu0 %388
      %390 = vrot.lane.b32.xlu0 %v322, 30
      %v391 = vpop.permute.xlu0 %390
      %vm392 = vcmp.lt.s32.totalorder %v225, 30
      %v393 = vsel %vm392, %v389, %v391
      %v394 = vsel %vm392, %v391, %v389
      %v395 = vsel %vm386, %v394, 0.0
      %v396 = vsel %vm387, %v393, 0.0
      %vm397 = vmand %vm299, %vm257
      %vm398 = vmand %vm300, %vm258
      %399 = vrot.lane.b32.xlu0 %v223, 18
      %v400 = vpop.permute.xlu0 %399
      %401 = vrot.lane.b32.xlu0 %v322, 18
      %v402 = vpop.permute.xlu0 %401
      %vm403 = vcmp.lt.s32.totalorder %v225, 18
      %v404 = vsel %vm403, %v400, %v402
      %v405 = vsel %vm403, %v402, %v400
      %v406 = vsel %vm397, %v405, 0.0
      %v407 = vsel %vm398, %v404, 0.0
      %vm408 = vmand %vm299, %vm265
      %vm409 = vmand %vm300, %vm266
      %410 = vrot.lane.b32.xlu0 %v223, 17
      %v411 = vpop.permute.xlu0 %410
      %412 = vrot.lane.b32.xlu0 %v322, 17
      %v413 = vpop.permute.xlu0 %412
      %vm414 = vcmp.lt.s32.totalorder %v225, 17
      %v415 = vsel %vm414, %v411, %v413
      %v416 = vsel %vm414, %v413, %v411
      %v417 = vsel %vm408, %v416, 0.0
      %v418 = vsel %vm409, %v415, 0.0
      %vm419 = vmand %vm299, %vm271
      %vm420 = vmand %vm300, %vm272
      %421 = vrot.lane.b32.xlu0 %v223, 16
      %v422 = vpop.permute.xlu0 %421
      %423 = vrot.lane.b32.xlu0 %v322, 16
      %v424 = vpop.permute.xlu0 %423
      %vm425 = vcmp.lt.s32.totalorder %v225, 16
      %v426 = vsel %vm425, %v422, %v424
      %v427 = vsel %vm425, %v424, %v422
      %v428 = vsel %vm419, %v427, 0.0
      %v429 = vsel %vm420, %v426, 0.0
      %v432 = vrot.slane %v406, 4
      %v433 = vrot.slane %v407, 4
      %v438 = vrot.slane %v428, 4
      %v439 = vrot.slane %v429, 4
      %v442 = vsel %vm176, %v395, %v432
      %v443 = vsel %vm176, %v396, %v433
      %v444 = vsel %vm176, %v417, %v438
      %v445 = vsel %vm176, %v418, %v439
      %v446 = vpack.c.bf16 %v444, %v442
      %v447 = vpack.c.bf16 %v445, %v443
      %448 = vst [vmem:[#allocation2 + $0x10] sm:$0xff] %v446
      %449 = vst [vmem:[#allocation2 + $0x18] sm:$0xff] %v447
      %vm450 = vmand %vm299, %vm279
      %vm451 = vmand %vm300, %vm280
      %452 = vrot.lane.b32.xlu0 %v223, 15
      %v453 = vpop.permute.xlu0 %452
      %454 = vrot.lane.b32.xlu0 %v322, 15
      %v455 = vpop.permute.xlu0 %454
      %vm456 = vcmp.lt.s32.totalorder %v225, 15
      %v457 = vsel %vm456, %v453, %v455
      %v458 = vsel %vm456, %v455, %v453
      %v459 = vsel %vm450, %v458, 0.0
      %v460 = vsel %vm451, %v457, 0.0
      %vm461 = vmand %vm299, %vm287
      %vm462 = vmand %vm300, %vm288
      %463 = vrot.lane.b32.xlu0 %v223, 14
      %v464 = vpop.permute.xlu0 %463
      %465 = vrot.lane.b32.xlu0 %v322, 14
      %v466 = vpop.permute.xlu0 %465
      %vm467 = vcmp.lt.s32.totalorder %v225, 14
      %v468 = vsel %vm467, %v464, %v466
      %v469 = vsel %vm467, %v466, %v464
      %v470 = vsel %vm461, %v469, 0.0
      %v471 = vsel %vm462, %v468, 0.0
      %vm472 = vmand %vm305, %vm257
      %vm473 = vmand %vm306, %vm258
      %474 = vrot.lane.b32.xlu0 %v223, 2
      %v475 = vpop.permute.xlu0 %474
      %476 = vrot.lane.b32.xlu0 %v322, 2
      %v477 = vpop.permute.xlu0 %476
      %vm478 = vcmp.lt.s32.totalorder %v225, 2
      %v479 = vsel %vm478, %v475, %v477
      %v480 = vsel %vm478, %v477, %v475
      %v481 = vsel %vm472, %v480, 0.0
      %v482 = vsel %vm473, %v479, 0.0
      %vm483 = vmand %vm305, %vm265
      %vm484 = vmand %vm306, %vm266
      %485 = vrot.lane.b32.xlu0 %v223, 1
      %v486 = vpop.permute.xlu0 %485
      %487 = vrot.lane.b32.xlu0 %v322, 1
      %v488 = vpop.permute.xlu0 %487
      %vm489 = vcmp.lt.s32.totalorder %v225, 1
      %v490 = vsel %vm489, %v486, %v488
      %v491 = vsel %vm489, %v488, %v486
      %v492 = vsel %vm483, %v491, 0.0
      %v493 = vsel %vm484, %v490, 0.0
      %v496 = vrot.slane %v470, 4
      %v497 = vrot.slane %v471, 4
      %v502 = vrot.slane %v492, 4
      %v503 = vrot.slane %v493, 4
      %v506 = vsel %vm176, %v459, %v496
      %v507 = vsel %vm176, %v460, %v497
      %v508 = vsel %vm176, %v481, %v502
      %v509 = vsel %vm176, %v482, %v503
      %v510 = vpack.c.bf16 %v508, %v506
      %v511 = vpack.c.bf16 %v509, %v507
      %512 = vst [vmem:[#allocation2 + $0x20] sm:$0xff] %v510
      %513 = vst [vmem:[#allocation2 + $0x28] sm:$0xff] %v511
      %vm514 = vmand %vm305, %vm271
      %vm515 = vmand %vm306, %vm272
      %v516 = vsel %vm514, %v223, 0.0
      %v517 = vsel %vm515, %v322, 0.0
      %vm518 = vmand %vm305, %vm279
      %vm519 = vmand %vm306, %vm280
      %520 = vrot.lane.b32.xlu0 %v223, 127
      %v521 = vpop.permute.xlu0 %520
      %522 = vrot.lane.b32.xlu0 %v322, 127
      %v523 = vpop.permute.xlu0 %522
      %vm524 = vcmp.lt.s32.totalorder %v225, 127
      %v525 = vsel %vm524, %v521, %v523
      %v526 = vsel %vm524, %v523, %v521
      %v527 = vsel %vm518, %v525, 0.0
      %v528 = vsel %vm519, %v526, 0.0
      %vm529 = vmand %vm305, %vm287
      %vm530 = vmand %vm306, %vm288
      %531 = vrot.lane.b32.xlu0 %v223, 126
      %v532 = vpop.permute.xlu0 %531
      %533 = vrot.lane.b32.xlu0 %v322, 126
      %v534 = vpop.permute.xlu0 %533
      %vm535 = vcmp.lt.s32.totalorder %v225, 126
      %v536 = vsel %vm535, %v532, %v534
      %v537 = vsel %vm535, %v534, %v532
      %v538 = vsel %vm529, %v536, 0.0
      %v539 = vsel %vm530, %v537, 0.0
      %vm540 = vmand %vm311, %vm257
      %vm541 = vmand %vm312, %vm258
      %542 = vrot.lane.b32.xlu0 %v223, 114
      %v543 = vpop.permute.xlu0 %542
      %544 = vrot.lane.b32.xlu0 %v322, 114
      %v545 = vpop.permute.xlu0 %544
      %vm546 = vcmp.lt.s32.totalorder %v225, 114
      %v547 = vsel %vm546, %v543, %v545
      %v548 = vsel %vm546, %v545, %v543
      %v549 = vsel %vm540, %v547, 0.0
      %v550 = vsel %vm541, %v548, 0.0
      %v553 = vrot.slane %v527, 4
      %v554 = vrot.slane %v528, 4
      %v559 = vrot.slane %v549, 4
      %v560 = vrot.slane %v550, 4
      %v563 = vsel %vm176, %v516, %v553
      %v564 = vsel %vm176, %v517, %v554
      %v565 = vsel %vm176, %v538, %v559
      %v566 = vsel %vm176, %v539, %v560
      %v567 = vpack.c.bf16 %v565, %v563
      %v568 = vpack.c.bf16 %v566, %v564
      %569 = vst [vmem:[#allocation2 + $0x30] sm:$0xff] %v567
      %570 = vst [vmem:[#allocation2 + $0x38] sm:$0xff] %v568
      %vm571 = vmand %vm311, %vm265
      %vm572 = vmand %vm312, %vm266
      %573 = vrot.lane.b32.xlu0 %v223, 113
      %v574 = vpop.permute.xlu0 %573
      %575 = vrot.lane.b32.xlu0 %v322, 113
      %v576 = vpop.permute.xlu0 %575
      %vm577 = vcmp.lt.s32.totalorder %v225, 113
      %v578 = vsel %vm577, %v574, %v576
      %v579 = vsel %vm577, %v576, %v574
      %v580 = vsel %vm571, %v578, 0.0
      %v581 = vsel %vm572, %v579, 0.0
      %vm582 = vmand %vm311, %vm271
      %vm583 = vmand %vm312, %vm272
      %584 = vrot.lane.b32.xlu0 %v223, 112
      %v585 = vpop.permute.xlu0 %584
      %586 = vrot.lane.b32.xlu0 %v322, 112
      %v587 = vpop.permute.xlu0 %586
      %vm588 = vcmp.lt.s32.totalorder %v225, 112
      %v589 = vsel %vm588, %v585, %v587
      %v590 = vsel %vm588, %v587, %v585
      %v591 = vsel %vm582, %v589, 0.0
      %v592 = vsel %vm583, %v590, 0.0
      %vm593 = vmand %vm311, %vm279
      %vm594 = vmand %vm312, %vm280
      %595 = vrot.lane.b32.xlu0 %v223, 111
      %v596 = vpop.permute.xlu0 %595
      %597 = vrot.lane.b32.xlu0 %v322, 111
      %v598 = vpop.permute.xlu0 %597
      %vm599 = vcmp.lt.s32.totalorder %v225, 111
      %v600 = vsel %vm599, %v596, %v598
      %v601 = vsel %vm599, %v598, %v596
      %v602 = vsel %vm593, %v600, 0.0
      %v603 = vsel %vm594, %v601, 0.0
      %vm604 = vmand %vm311, %vm287
      %vm605 = vmand %vm312, %vm288
      %606 = vrot.lane.b32.xlu0 %v223, 110
      %v607 = vpop.permute.xlu0 %606
      %608 = vrot.lane.b32.xlu0 %v322, 110
      %v609 = vpop.permute.xlu0 %608
      %vm610 = vcmp.lt.s32.totalorder %v225, 110
      %v611 = vsel %vm610, %v607, %v609
      %v612 = vsel %vm610, %v609, %v607
      %v613 = vsel %vm604, %v611, 0.0
      %v614 = vsel %vm605, %v612, 0.0
      %v617 = vrot.slane %v591, 4
      %v618 = vrot.slane %v592, 4
      %v623 = vrot.slane %v613, 4
      %v624 = vrot.slane %v614, 4
      %v627 = vsel %vm176, %v580, %v617
      %v628 = vsel %vm176, %v581, %v618
      %v629 = vsel %vm176, %v602, %v623
      %v630 = vsel %vm176, %v603, %v624
      %v631 = vpack.c.bf16 %v629, %v627
      %v632 = vpack.c.bf16 %v630, %v628
      %633 = vst [vmem:[#allocation2 + $0x40] sm:$0xff] %v631
      %634 = vst [vmem:[#allocation2 + $0x48] sm:$0xff] %v632
      %vm635 = vmand %vm317, %vm257
      %vm636 = vmand %vm318, %vm258
      %637 = vrot.lane.b32.xlu0 %v223, 98
      %v638 = vpop.permute.xlu0 %637
      %639 = vrot.lane.b32.xlu0 %v322, 98
      %v640 = vpop.permute.xlu0 %639
      %vm641 = vcmp.lt.s32.totalorder %v225, 98
      %v642 = vsel %vm641, %v638, %v640
      %v643 = vsel %vm641, %v640, %v638
      %v644 = vsel %vm635, %v642, 0.0
      %v645 = vsel %vm636, %v643, 0.0
      %vm646 = vmand %vm317, %vm265
      %vm647 = vmand %vm318, %vm266
      %648 = vrot.lane.b32.xlu0 %v223, 97
      %v649 = vpop.permute.xlu0 %648
      %650 = vrot.lane.b32.xlu0 %v322, 97
      %v651 = vpop.permute.xlu0 %650
      %vm652 = vcmp.lt.s32.totalorder %v225, 97
      %v653 = vsel %vm652, %v649, %v651
      %v654 = vsel %vm652, %v651, %v649
      %v655 = vsel %vm646, %v653, 0.0
      %v656 = vsel %vm647, %v654, 0.0
      %vm657 = vmand %vm317, %vm271
      %vm658 = vmand %vm318, %vm272
      %659 = vrot.lane.b32.xlu0 %v223, 96
      %v660 = vpop.permute.xlu0 %659
      %661 = vrot.lane.b32.xlu0 %v322, 96
      %v662 = vpop.permute.xlu0 %661
      %vm663 = vcmp.lt.s32.totalorder %v225, 96
      %v664 = vsel %vm663, %v660, %v662
      %v665 = vsel %vm663, %v662, %v660
      %v666 = vsel %vm657, %v664, 0.0
      %v667 = vsel %vm658, %v665, 0.0
      %vm668 = vmand %vm317, %vm279
      %vm669 = vmand %vm318, %vm280
      %670 = vrot.lane.b32.xlu0 %v223, 95
      %v671 = vpop.permute.xlu0 %670
      %672 = vrot.lane.b32.xlu0 %v322, 95
      %v673 = vpop.permute.xlu0 %672
      %vm674 = vcmp.lt.s32.totalorder %v225, 95
      %v675 = vsel %vm674, %v671, %v673
      %v676 = vsel %vm674, %v673, %v671
      %v677 = vsel %vm668, %v675, 0.0
      %v678 = vsel %vm669, %v676, 0.0
      %v681 = vrot.slane %v655, 4
      %v682 = vrot.slane %v656, 4
      %v687 = vrot.slane %v677, 4
      %v688 = vrot.slane %v678, 4
      %v691 = vsel %vm176, %v644, %v681
      %v692 = vsel %vm176, %v645, %v682
      %v693 = vsel %vm176, %v666, %v687
      %v694 = vsel %vm176, %v667, %v688
      %v695 = vpack.c.bf16 %v693, %v691
      %v696 = vpack.c.bf16 %v694, %v692
      %697 = vst [vmem:[#allocation2 + $0x50] sm:$0xff] %v695
      %698 = vst [vmem:[#allocation2 + $0x58] sm:$0xff] %v696
      %vm699 = vmand %vm317, %vm287
      %vm700 = vmand %vm318, %vm288
      %701 = vrot.lane.b32.xlu0 %v223, 94
      %v702 = vpop.permute.xlu0 %701
      %703 = vrot.lane.b32.xlu0 %v322, 94
      %v704 = vpop.permute.xlu0 %703
      %vm705 = vcmp.lt.s32.totalorder %v225, 94
      %v706 = vsel %vm705, %v702, %v704
      %v707 = vsel %vm705, %v704, %v702
      %v708 = vsel %vm699, %v706, 0.0
      %v709 = vsel %vm700, %v707, 0.0
      %v710 = vsel %vm176, %v708, 0.0
      %v711 = vsel %vm176, %v709, 0.0
      %v712 = vpack.c.bf16 0.0, %v710
      %v713 = vpack.c.bf16 0.0, %v711
      %714 = vst [vmem:[#allocation2 + $0x60] sm:$0xff] %v712
      %715 = vst [vmem:[#allocation2 + $0x68] sm:$0xff] %v713
      %v716 = vld [vmem:[%s1] sm:$0xf]
      %v717 = vld [vmem:[%s1 + $0x4] sm:$0xf]
      %v718 = vld [vmem:[#allocation2] sm:$0xff]
      %v719 = vld [vmem:[#allocation2 + $0x8] sm:$0xff]
      %v720 = vld [vmem:[#allocation2 + $0x10] sm:$0xff]
      %v721 = vld [vmem:[#allocation2 + $0x18] sm:$0xff]
      %v722 = vld [vmem:[#allocation2 + $0x20] sm:$0xff]
      %v723 = vld [vmem:[#allocation2 + $0x28] sm:$0xff]
      %v724 = vld [vmem:[#allocation2 + $0x30] sm:$0xff]
      %v725 = vld [vmem:[#allocation2 + $0x38] sm:$0xff]
      %v726 = vld [vmem:[#allocation2 + $0x40] sm:$0xff]
      %v727 = vld [vmem:[#allocation2 + $0x48] sm:$0xff]
      %v728 = vld [vmem:[#allocation2 + $0x50] sm:$0xff]
      %v729 = vld [vmem:[#allocation2 + $0x58] sm:$0xff]
      %v730 = vld [vmem:[#allocation2 + $0x60] sm:$0xff]
      %v731 = vld [vmem:[#allocation2 + $0x68] sm:$0xff]
      %v734 = vunpack.c.l.b16 %v716
      %v735 = vunpack.c.l.b16 %v717
      %v736 = vpack.c.b16 %v735, %v734
      %vm737 = vcmask 916480
      %v739 = vsel %vm737, %v736, 0
      %741 = vmatprep.subr.bf16.mxu0 %v719
      %742 = vmatpush1.bf16.msra.mxu0 %v718
      %743 = vmatprep.subr.bf16.mxu0 %v721
      %744 = vmatpush1.bf16.msra.mxu0 %v720
      %745 = vmatprep.subr.bf16.mxu0 %v723
      %746 = vmatpush1.bf16.msra.mxu0 %v722
      %747 = vmatprep.subr.bf16.mxu0 %v725
      %748 = vmatpush1.bf16.msra.mxu0 %v724
      %749 = vmatprep.subr.bf16.mxu0 %v727
      %750 = vmatpush1.bf16.msra.mxu0 %v726
      %751 = vmatprep.subr.bf16.mxu0 %v729
      %752 = vmatpush1.bf16.msra.mxu0 %v728
      %753 = vmatprep.subr.bf16.mxu0 %v731
      %754 = vmatpush1.bf16.msra.mxu0 %v730
      %755 = vmatprep.subr.bf16.mxu0 0
      %756 = vmatpush1.bf16.msra.mxu0 0
      %757 = vmatprep.subr.bf16.mxu0 0
      %758 = vmatpush1.bf16.msra.mxu0 0
      %759 = vmatprep.subr.bf16.mxu0 0
      %760 = vmatpush1.bf16.msra.mxu0 0
      %761 = vmatprep.subr.bf16.mxu0 0
      %762 = vmatpush1.bf16.msra.mxu0 0
      %763 = vmatprep.subr.bf16.mxu0 0
      %764 = vmatpush1.bf16.msra.mxu0 0
      %765 = vmatprep.subr.bf16.mxu0 0
      %766 = vmatpush1.bf16.msra.mxu0 0
      %767 = vmatprep.subr.bf16.mxu0 0
      %768 = vmatpush1.bf16.msra.mxu0 0
      %769 = vmatprep.subr.bf16.mxu0 0
      %770 = vmatpush1.bf16.msra.mxu0 0
      %771 = vmatprep.subr.bf16.mxu0 0
      %772 = vmatpush1.bf16.msra.mxu0 0
      %773 = vmatprep.mubr.bf16.mxu0 0
      %774 = vmatmul.mubr.bf16.gmra.mrb[0].mxu0 %v739
      %v775 = vpop.f32.mrb[0].mxu0
      %v776 = vadd.f32 0.0, %v775
      %v777 = vpop.f32.mrb[0].mxu0
      %v778 = vadd.f32 0.0, %v777
      %v779 = vpop.f32.mrb[0].mxu0
      %v780 = vadd.f32 0.0, %v779
      %v781 = vpop.f32.mrb[0].mxu0
      %v782 = vadd.f32 0.0, %v781
      %783 = vdwg.mxu0
      %v784 = vadd.f32 %v776, %v778
      %785 = vadd.xlane.f32.xlu0 %v784
      %v786 = vpop.xlane.xlu0 %785
      %v787 = vadd.f32 %v780, %v782
      %788 = vadd.xlane.f32.xlu0 %v787
      %v789 = vpop.xlane.xlu0 %788
      %v790 = vmul.f32 %v786, 0.00390625
      %v791 = vmul.f32 %v789, 0.00390625
      %v792 = vsub.f32 %v776, %v790
      %v793 = vsub.f32 %v778, %v790
      %v794 = vsub.f32 %v780, %v791
      %v795 = vsub.f32 %v782, %v791
      %v796 = vmul.f32 %v792, %v792
      %v797 = vmul.f32 %v793, %v793
      %v798 = vmul.f32 %v794, %v794
      %v799 = vmul.f32 %v795, %v795
      %v800 = vadd.f32 %v796, %v797
      %801 = vadd.xlane.f32.xlu0 %v800
      %v802 = vpop.xlane.xlu0 %801
      %v803 = vadd.f32 %v798, %v799
      %804 = vadd.xlane.f32.xlu0 %v803
      %v805 = vpop.xlane.xlu0 %804
      %v806 = vmul.f32 %v802, 0.00390625
      %v807 = vmul.f32 %v805, 0.00390625
      %v808 = vadd.f32 %v806, 1e-05
      %v809 = vadd.f32 %v807, 1e-05
      %v810 = vrsqrt.pop %v808
      %v811 = vrsqrt.pop %v809
      %v812 = vmul.f32 %v792, %v810
      %v813 = vmul.f32 %v793, %v810
      %v814 = vmul.f32 %v794, %v811
      %v815 = vmul.f32 %v795, %v811
      %v816 = vmul.f32 %v812, %v812
      %v817 = vmul.f32 %v813, %v813
      %v818 = vmul.f32 %v814, %v814
      %v819 = vmul.f32 %v815, %v815
      %v820 = vmul.f32 %v812, %v816
      %v821 = vmul.f32 %v813, %v817
      %v822 = vmul.f32 %v814, %v818
      %v823 = vmul.f32 %v815, %v819
      %v824 = vmul.f32 %v820, 0.044715
      %v825 = vmul.f32 %v821, 0.044715
      %v826 = vmul.f32 %v822, 0.044715
      %v827 = vmul.f32 %v823, 0.044715
      %v828 = vadd.f32 %v812, %v824
      %v829 = vadd.f32 %v813, %v825
      %v830 = vadd.f32 %v814, %v826
      %v831 = vadd.f32 %v815, %v827
      %v832 = vmul.f32 %v828, 0.7978846
      %v833 = vmul.f32 %v829, 0.7978846
      %v834 = vmul.f32 %v830, 0.7978846
      %v835 = vmul.f32 %v831, 0.7978846
      %v836 = vtanh.pop %v832
      %v837 = vtanh.pop %v833
      %v838 = vtanh.pop %v834
      %v839 = vtanh.pop %v835
      %v840 = vadd.f32 %v836, 1.0
      %v841 = vadd.f32 %v837, 1.0
      %v842 = vadd.f32 %v838, 1.0
      %v843 = vadd.f32 %v839, 1.0
      %v844 = vmul.f32 %v840, 0.5
      %v845 = vmul.f32 %v841, 0.5
      %v846 = vmul.f32 %v842, 0.5
      %v847 = vmul.f32 %v843, 0.5
      %v848 = vmul.f32 %v812, %v844
      %v849 = vmul.f32 %v813, %v845
      %v850 = vmul.f32 %v814, %v846
      %v851 = vmul.f32 %v815, %v847
      %v852 = vpack.c.bf16 %v850, %v848
      %v853 = vpack.c.bf16 %v851, %v849
      %v854 = vld [vmem:[%s2] sm:$0xf]
      %v855 = vld [vmem:[%s2 + $0x4] sm:$0xf]
      %v858 = vunpack.c.l.b16 %v854
      %v859 = vunpack.c.l.b16 %v855
      %v860 = vpack.c.b16 %v859, %v858
      %vm861 = vcmask 130048
      %v863 = vsel %vm861, %v860, 0
      %865 = vmatprep.subr.bf16.mxu0 %v853
      %866 = vmatpush1.bf16.msra.mxu0 %v852
      %867 = vmatprep.subr.bf16.mxu0 0
      %868 = vmatpush1.bf16.msra.mxu0 0
      %869 = vmatprep.subr.bf16.mxu0 0
      %870 = vmatpush1.bf16.msra.mxu0 0
      %871 = vmatprep.subr.bf16.mxu0 0
      %872 = vmatpush1.bf16.msra.mxu0 0
      %873 = vmatprep.subr.bf16.mxu0 0
      %874 = vmatpush1.bf16.msra.mxu0 0
      %875 = vmatprep.subr.bf16.mxu0 0
      %876 = vmatpush1.bf16.msra.mxu0 0
      %877 = vmatprep.subr.bf16.mxu0 0
      %878 = vmatpush1.bf16.msra.mxu0 0
      %879 = vmatprep.subr.bf16.mxu0 0
      %880 = vmatpush1.bf16.msra.mxu0 0
      %881 = vmatprep.subr.bf16.mxu0 0
      %882 = vmatpush1.bf16.msra.mxu0 0
      %883 = vmatprep.subr.bf16.mxu0 0
      %884 = vmatpush1.bf16.msra.mxu0 0
      %885 = vmatprep.subr.bf16.mxu0 0
      %886 = vmatpush1.bf16.msra.mxu0 0
      %887 = vmatprep.subr.bf16.mxu0 0
      %888 = vmatpush1.bf16.msra.mxu0 0
      %889 = vmatprep.subr.bf16.mxu0 0
      %890 = vmatpush1.bf16.msra.mxu0 0
      %891 = vmatprep.subr.bf16.mxu0 0
      %892 = vmatpush1.bf16.msra.mxu0 0
      %893 = vmatprep.subr.bf16.mxu0 0
      %894 = vmatpush1.bf16.msra.mxu0 0
      %895 = vmatprep.subr.bf16.mxu0 0
      %896 = vmatpush1.bf16.msra.mxu0 0
      %897 = vmatprep.mubr.bf16.mxu0 0
      %898 = vmatmul.mubr.bf16.gmra.mrb[0].mxu0 %v863
      %v899 = vpop.f32.mrb[0].mxu0
      %v900 = vadd.f32 0.0, %v899
      %v901 = vpop.f32.mrb[0].mxu0
      %v902 = vadd.f32 0.0, %v901
      %v903 = vpop.f32.mrb[0].mxu0
      %v904 = vadd.f32 0.0, %v903
      %v905 = vpop.f32.mrb[0].mxu0
      %v906 = vadd.f32 0.0, %v905
      %907 = vdwg.mxu0
      %908 = vst [vmem:[%s170] sm:$0xff] %v900
      %909 = vst [vmem:[%s170 + $0x8] sm:$0xff] %v902
      %910 = vst [vmem:[%s170 + $0x10] sm:$0xff] %v904
      %911 = vst [vmem:[%s170 + $0x18] sm:$0xff] %v906
      %p912 = scmp.lt.s32.totalorder %s14, 1
      %s913 = scalar_select %p912, %s14, 1
      %s914 = smul.addr %s913, 4
      %s915 = smul.addr %s914, 8
      %s916 = scalar_lea.vmem %s3, %s915
      // Predicated region
      $region33: #{decoder_forward.1} parent=31 // pred_check
        %p917 = pneg %p100
      $region34: #{decoder_forward.1} parent=31 // pred_check_branch
        %919 = sbr.rel (%p917) target = $region36
      $region35: #{decoder_forward.1} parent=31 // pred_region
        _
      $region36: #{decoder_forward.1} parent=31 // pred_fallthru
        _
    $region32: #{decoder_forward.1} parent=5 // pred_fallthru
      _
    %p920 = scmp.le.s32.totalorder 2, %s9
    // Predicated region
    $region37: #{decoder_forward.1} parent=5 // pred_check
      %p921 = pneg %p920
    $region38: #{decoder_forward.1} parent=5 // pred_check_branch
      %923 = sbr.rel (%p921) target = $region40
    $region39: #{decoder_forward.1} parent=5 // pred_region
      %s924 = ssub.s32 %s9, 2
      // Predicated region
      $region41: #{decoder_forward.1} parent=39 // pred_check
        %p925 = pneg %p106
      $region42: #{decoder_forward.1} parent=39 // pred_check_branch
        %927 = sbr.rel (%p925) target = $region44
      $region43: #{decoder_forward.1} parent=39 // pred_region
        %p928 = scmp.lt.s32.totalorder %s15, 1
        %s929 = scalar_select %p928, %s15, 1
        %s930 = smul.addr %s929, 4
        %s931 = smul.addr %s930, 8
        %s932 = scalar_lea.vmem %s3, %s931
      $region44: #{decoder_forward.1} parent=39 // pred_fallthru
        _
    $region40: #{decoder_forward.1} parent=5 // pred_fallthru
      _
  $region6: #{decoder_forward.1} parent=0 // loop_footer
    %s13 = sadd.s32 1, %s9
  $region7: #{decoder_forward.1} parent=0 // loop_footer_branch
    %8 = sbr.rel target = $region3
  $region8: #{decoder_forward.1} parent=0 // loop_exit
    _

</llo_original>
